<compile_context>
chip_gen: v7x
topology: tpu7x:2x2x1
jax: 0.10.0
libtpu: 0.0.40
codegen_flags: <defaults>
</compile_context>

<pallas_src>
import functools
import math

import jax
import jax.numpy as jnp
from jax.experimental import pallas as pl
from jax.experimental.pallas import tpu as pltpu

LANE = 128
SUBLANE = 8

# Layer dimensions from the module's __init__:
#   input_dim -> 22 -> 20 -> 18 -> 15 -> 12 -> 5 -> 1
HIDDEN_DIMS = (22, 20, 18, 15, 12, 5, 1)


def _round_up(x, m):
    return (x + m - 1) // m * m


def _mlp_kernel(x_ref, w_ref, b_ref, o_ref, *, n_layers, compute_dtype):
    """Fused n-layer MLP: h = relu(h @ W_i + b_i); all tensors lane-dense (128 wide)."""
    h = x_ref[...].astype(jnp.float32)                        # (TB, 128)
    for i in range(n_layers):                                 # unrolled at trace time
        w = w_ref[i]                                          # (128, 128)  static slice
        b = b_ref[i]                                          # (1, 128)    f32
        acc = jnp.dot(h.astype(compute_dtype), w,
                      preferred_element_type=jnp.float32)     # MXU, f32 accumulate
        h = jnp.maximum(acc + b, 0.0)                         # bias + relu in f32 (VPU)
        # TODO(synk): dropout between layers is identity at inference; training-mode
        # stochastic masking (pltpu.prng_*) is intentionally not implemented here.
    o_ref[...] = h.astype(o_ref.dtype)


def linear_regression_forward(x, params, *, compute_dtype=jnp.float32,
                              block_rows=512):
    """x: (B, input_dim) float32.  params: list of (W, b), W (in, out), b (1, out)."""
    B, in_dim = x.shape
    n_layers = len(params)
    out_dim = params[-1][0].shape[1]
    assert in_dim <= LANE and all(w.shape[1] <= LANE for w, _ in params)

    # ---- host-side packing: one lane-dense weight slab + one bias slab ----
    w_slab = jnp.zeros((n_layers, LANE, LANE), compute_dtype)
    b_slab = jnp.zeros((n_layers, 1, LANE), jnp.float32)
    for i, (w, b) in enumerate(params):
        fi, fo = w.shape
        w_slab = w_slab.at[i, :fi, :fo].set(w.astype(compute_dtype))
        b_slab = b_slab.at[i, 0, :fo].set(b.reshape(-1).astype(jnp.float32))

    # ---- pad batch to a sublane-aligned tile and input lanes to 128 -------
    tb = min(block_rows, _round_up(B, SUBLANE))
    b_pad = _round_up(B, tb)
    x_p = jnp.zeros((b_pad, LANE), jnp.float32).at[:B, :in_dim].set(
        x.astype(jnp.float32))

    out = pl.pallas_call(
        functools.partial(_mlp_kernel, n_layers=n_layers,
                          compute_dtype=compute_dtype),
        out_shape=jax.ShapeDtypeStruct((b_pad, LANE), jnp.float32),
        grid=(b_pad // tb,),
        in_specs=[
            pl.BlockSpec((tb, LANE), lambda i: (i, 0)),                 # activations
            pl.BlockSpec((n_layers, LANE, LANE), lambda i: (0, 0, 0)),  # weights (VMEM-resident)
            pl.BlockSpec((n_layers, 1, LANE), lambda i: (0, 0, 0)),     # biases  (VMEM-resident)
        ],
        out_specs=pl.BlockSpec((tb, LANE), lambda i: (i, 0)),
        compiler_params=pltpu.CompilerParams(
            dimension_semantics=("parallel",)),   # lets v7x split the batch over 2 TCs
    )(x_p, w_slab, b_slab)

    return out[:B, :out_dim]


def init_params(input_dim, key):
    """Xavier-uniform weights (as in the torch module); uniform(+-1/sqrt(fan_in)) biases."""
    dims = (input_dim,) + HIDDEN_DIMS
    params = []
    for i in range(len(HIDDEN_DIMS)):
        fan_in, fan_out = dims[i], dims[i + 1]
        key, wk, bk = jax.random.split(key, 3)
        limit = math.sqrt(6.0 / (fan_in + fan_out))
        w = jax.random.uniform(wk, (fan_in, fan_out), jnp.float32,
                               minval=-limit, maxval=limit)
        blim = 1.0 / math.sqrt(fan_in)
        b = jax.random.uniform(bk, (1, fan_out), jnp.float32,
                               minval=-blim, maxval=blim)
        params.append((w, b))
    return params


def _reference_forward(x, params):
    h = x
    for (w, b) in params:
        h = jnp.maximum(h @ w + b, 0.0)   # module applies relu after EVERY fc, incl. fc7
    return h


if __name__ == "__main__":
    key = jax.random.PRNGKey(0)
    key, xk, pk, x2k = jax.random.split(key, 4)

    input_dim = 32
    params = init_params(input_dim, pk)

    # Small demo batch.
    x = jax.random.normal(xk, (8, input_dim), dtype=jnp.float32)
    out = jax.block_until_ready(linear_regression_forward(x, params))
    ref = _reference_forward(x, params)
    assert out.shape == (8, 1)
    assert jnp.allclose(out, ref, atol=1e-4, rtol=1e-4)

    # Larger, non-tile-aligned batch: exercises the 1-D "parallel" grid,
    # batch padding and VMEM-resident weight blocks.
    x2 = jax.random.normal(x2k, (1000, input_dim), dtype=jnp.float32)
    out2 = jax.block_until_ready(linear_regression_forward(x2, params))
    ref2 = _reference_forward(x2, params)
    assert out2.shape == (1000, 1)
    assert jnp.allclose(out2, ref2, atol=1e-4, rtol=1e-4)

    # bf16 matmul path (f32 accumulate; bias/relu in f32) — bandwidth lever on v6e/v7x.
    out_bf16 = jax.block_until_ready(
        linear_regression_forward(x2, params, compute_dtype=jnp.bfloat16))
    assert jnp.allclose(out_bf16, ref2, atol=5e-2, rtol=5e-2)

    print("KERNEL_OK")
</pallas_src>

<mosaic_0001>
module attributes {stable_mosaic.version = 11 : i64} {
  func.func @_mlp_kernel(%arg0: i32, %arg1: memref<8x128xf32, #tpu.memory_space<vmem>>, %arg2: memref<7x128x128xf32, #tpu.memory_space<vmem>>, %arg3: memref<7x1x128xf32, #tpu.memory_space<vmem>>, %arg4: memref<8x128xf32, #tpu.memory_space<vmem>>) attributes {dimension_semantics = [#tpu.dimension_semantics<parallel>], iteration_bounds = array<i64: 1>, scalar_prefetch = 0 : i64, scratch_operands = 0 : i64, tpu.core_type = #tpu.core_type<tc>, window_params = [{transform_indices = @transform_0, window_bounds = array<i64: 8, 128>}, {pipeline_mode = #tpu.pipeline_mode<synchronous>, transform_indices = @transform_1, window_bounds = array<i64: 7, 128, 128>}, {pipeline_mode = #tpu.pipeline_mode<synchronous>, transform_indices = @transform_2, window_bounds = array<i64: 7, 1, 128>}, {transform_indices = @transform_3, window_bounds = array<i64: 8, 128>}]} {
    %c0 = arith.constant 0 : index
    %c0_0 = arith.constant 0 : index
    %0 = vector.load %arg1[%c0, %c0_0] : memref<8x128xf32, #tpu.memory_space<vmem>>, vector<8x128xf32>
    %c0_1 = arith.constant 0 : index
    %c0_2 = arith.constant 0 : index
    %c0_3 = arith.constant 0 : index
    %1 = vector.load %arg2[%c0_1, %c0_2, %c0_3] : memref<7x128x128xf32, #tpu.memory_space<vmem>>, vector<1x128x128xf32>
    %2 = vector.shape_cast %1 : vector<1x128x128xf32> to vector<128x128xf32>
    %c0_4 = arith.constant 0 : index
    %c0_5 = arith.constant 0 : index
    %c0_6 = arith.constant 0 : index
    %3 = vector.load %arg3[%c0_4, %c0_5, %c0_6] : memref<7x1x128xf32, #tpu.memory_space<vmem>>, vector<1x1x128xf32>
    %4 = vector.shape_cast %3 : vector<1x1x128xf32> to vector<1x128xf32>
    %cst = arith.constant dense<0.000000e+00> : vector<8x128xf32>
    %5 = tpu.matmul %0, %2, %cst {dimension_numbers = #tpu.dot_dimension_numbers<[1], [0], [0], [1], [0, 0, 1, 1], [], []>} : vector<8x128xf32>, vector<128x128xf32>, vector<8x128xf32> -> vector<8x128xf32>
    %6 = vector.broadcast %4 : vector<1x128xf32> to vector<8x128xf32>
    %7 = arith.addf %5, %6 : vector<8x128xf32>
    %cst_7 = arith.constant 0.000000e+00 : f32
    %8 = vector.broadcast %cst_7 : f32 to vector<8x128xf32>
    %9 = arith.maximumf %7, %8 : vector<8x128xf32>
    %c1 = arith.constant 1 : index
    %c0_8 = arith.constant 0 : index
    %c0_9 = arith.constant 0 : index
    %10 = vector.load %arg2[%c1, %c0_8, %c0_9] : memref<7x128x128xf32, #tpu.memory_space<vmem>>, vector<1x128x128xf32>
    %11 = vector.shape_cast %10 : vector<1x128x128xf32> to vector<128x128xf32>
    %c1_10 = arith.constant 1 : index
    %c0_11 = arith.constant 0 : index
    %c0_12 = arith.constant 0 : index
    %12 = vector.load %arg3[%c1_10, %c0_11, %c0_12] : memref<7x1x128xf32, #tpu.memory_space<vmem>>, vector<1x1x128xf32>
    %13 = vector.shape_cast %12 : vector<1x1x128xf32> to vector<1x128xf32>
    %cst_13 = arith.constant dense<0.000000e+00> : vector<8x128xf32>
    %14 = tpu.matmul %9, %11, %cst_13 {dimension_numbers = #tpu.dot_dimension_numbers<[1], [0], [0], [1], [0, 0, 1, 1], [], []>} : vector<8x128xf32>, vector<128x128xf32>, vector<8x128xf32> -> vector<8x128xf32>
    %15 = vector.broadcast %13 : vector<1x128xf32> to vector<8x128xf32>
    %16 = arith.addf %14, %15 : vector<8x128xf32>
    %cst_14 = arith.constant 0.000000e+00 : f32
    %17 = vector.broadcast %cst_14 : f32 to vector<8x128xf32>
    %18 = arith.maximumf %16, %17 : vector<8x128xf32>
    %c2 = arith.constant 2 : index
    %c0_15 = arith.constant 0 : index
    %c0_16 = arith.constant 0 : index
    %19 = vector.load %arg2[%c2, %c0_15, %c0_16] : memref<7x128x128xf32, #tpu.memory_space<vmem>>, vector<1x128x128xf32>
    %20 = vector.shape_cast %19 : vector<1x128x128xf32> to vector<128x128xf32>
    %c2_17 = arith.constant 2 : index
    %c0_18 = arith.constant 0 : index
    %c0_19 = arith.constant 0 : index
    %21 = vector.load %arg3[%c2_17, %c0_18, %c0_19] : memref<7x1x128xf32, #tpu.memory_space<vmem>>, vector<1x1x128xf32>
    %22 = vector.shape_cast %21 : vector<1x1x128xf32> to vector<1x128xf32>
    %cst_20 = arith.constant dense<0.000000e+00> : vector<8x128xf32>
    %23 = tpu.matmul %18, %20, %cst_20 {dimension_numbers = #tpu.dot_dimension_numbers<[1], [0], [0], [1], [0, 0, 1, 1], [], []>} : vector<8x128xf32>, vector<128x128xf32>, vector<8x128xf32> -> vector<8x128xf32>
    %24 = vector.broadcast %22 : vector<1x128xf32> to vector<8x128xf32>
    %25 = arith.addf %23, %24 : vector<8x128xf32>
    %cst_21 = arith.constant 0.000000e+00 : f32
    %26 = vector.broadcast %cst_21 : f32 to vector<8x128xf32>
    %27 = arith.maximumf %25, %26 : vector<8x128xf32>
    %c3 = arith.constant 3 : index
    %c0_22 = arith.constant 0 : index
    %c0_23 = arith.constant 0 : index
    %28 = vector.load %arg2[%c3, %c0_22, %c0_23] : memref<7x128x128xf32, #tpu.memory_space<vmem>>, vector<1x128x128xf32>
    %29 = vector.shape_cast %28 : vector<1x128x128xf32> to vector<128x128xf32>
    %c3_24 = arith.constant 3 : index
    %c0_25 = arith.constant 0 : index
    %c0_26 = arith.constant 0 : index
    %30 = vector.load %arg3[%c3_24, %c0_25, %c0_26] : memref<7x1x128xf32, #tpu.memory_space<vmem>>, vector<1x1x128xf32>
    %31 = vector.shape_cast %30 : vector<1x1x128xf32> to vector<1x128xf32>
    %cst_27 = arith.constant dense<0.000000e+00> : vector<8x128xf32>
    %32 = tpu.matmul %27, %29, %cst_27 {dimension_numbers = #tpu.dot_dimension_numbers<[1], [0], [0], [1], [0, 0, 1, 1], [], []>} : vector<8x128xf32>, vector<128x128xf32>, vector<8x128xf32> -> vector<8x128xf32>
    %33 = vector.broadcast %31 : vector<1x128xf32> to vector<8x128xf32>
    %34 = arith.addf %32, %33 : vector<8x128xf32>
    %cst_28 = arith.constant 0.000000e+00 : f32
    %35 = vector.broadcast %cst_28 : f32 to vector<8x128xf32>
    %36 = arith.maximumf %34, %35 : vector<8x128xf32>
    %c4 = arith.constant 4 : index
    %c0_29 = arith.constant 0 : index
    %c0_30 = arith.constant 0 : index
    %37 = vector.load %arg2[%c4, %c0_29, %c0_30] : memref<7x128x128xf32, #tpu.memory_space<vmem>>, vector<1x128x128xf32>
    %38 = vector.shape_cast %37 : vector<1x128x128xf32> to vector<128x128xf32>
    %c4_31 = arith.constant 4 : index
    %c0_32 = arith.constant 0 : index
    %c0_33 = arith.constant 0 : index
    %39 = vector.load %arg3[%c4_31, %c0_32, %c0_33] : memref<7x1x128xf32, #tpu.memory_space<vmem>>, vector<1x1x128xf32>
    %40 = vector.shape_cast %39 : vector<1x1x128xf32> to vector<1x128xf32>
    %cst_34 = arith.constant dense<0.000000e+00> : vector<8x128xf32>
    %41 = tpu.matmul %36, %38, %cst_34 {dimension_numbers = #tpu.dot_dimension_numbers<[1], [0], [0], [1], [0, 0, 1, 1], [], []>} : vector<8x128xf32>, vector<128x128xf32>, vector<8x128xf32> -> vector<8x128xf32>
    %42 = vector.broadcast %40 : vector<1x128xf32> to vector<8x128xf32>
    %43 = arith.addf %41, %42 : vector<8x128xf32>
    %cst_35 = arith.constant 0.000000e+00 : f32
    %44 = vector.broadcast %cst_35 : f32 to vector<8x128xf32>
    %45 = arith.maximumf %43, %44 : vector<8x128xf32>
    %c5 = arith.constant 5 : index
    %c0_36 = arith.constant 0 : index
    %c0_37 = arith.constant 0 : index
    %46 = vector.load %arg2[%c5, %c0_36, %c0_37] : memref<7x128x128xf32, #tpu.memory_space<vmem>>, vector<1x128x128xf32>
    %47 = vector.shape_cast %46 : vector<1x128x128xf32> to vector<128x128xf32>
    %c5_38 = arith.constant 5 : index
    %c0_39 = arith.constant 0 : index
    %c0_40 = arith.constant 0 : index
    %48 = vector.load %arg3[%c5_38, %c0_39, %c0_40] : memref<7x1x128xf32, #tpu.memory_space<vmem>>, vector<1x1x128xf32>
    %49 = vector.shape_cast %48 : vector<1x1x128xf32> to vector<1x128xf32>
    %cst_41 = arith.constant dense<0.000000e+00> : vector<8x128xf32>
    %50 = tpu.matmul %45, %47, %cst_41 {dimension_numbers = #tpu.dot_dimension_numbers<[1], [0], [0], [1], [0, 0, 1, 1], [], []>} : vector<8x128xf32>, vector<128x128xf32>, vector<8x128xf32> -> vector<8x128xf32>
    %51 = vector.broadcast %49 : vector<1x128xf32> to vector<8x128xf32>
    %52 = arith.addf %50, %51 : vector<8x128xf32>
    %cst_42 = arith.constant 0.000000e+00 : f32
    %53 = vector.broadcast %cst_42 : f32 to vector<8x128xf32>
    %54 = arith.maximumf %52, %53 : vector<8x128xf32>
    %c6 = arith.constant 6 : index
    %c0_43 = arith.constant 0 : index
    %c0_44 = arith.constant 0 : index
    %55 = vector.load %arg2[%c6, %c0_43, %c0_44] : memref<7x128x128xf32, #tpu.memory_space<vmem>>, vector<1x128x128xf32>
    %56 = vector.shape_cast %55 : vector<1x128x128xf32> to vector<128x128xf32>
    %c6_45 = arith.constant 6 : index
    %c0_46 = arith.constant 0 : index
    %c0_47 = arith.constant 0 : index
    %57 = vector.load %arg3[%c6_45, %c0_46, %c0_47] : memref<7x1x128xf32, #tpu.memory_space<vmem>>, vector<1x1x128xf32>
    %58 = vector.shape_cast %57 : vector<1x1x128xf32> to vector<1x128xf32>
    %cst_48 = arith.constant dense<0.000000e+00> : vector<8x128xf32>
    %59 = tpu.matmul %54, %56, %cst_48 {dimension_numbers = #tpu.dot_dimension_numbers<[1], [0], [0], [1], [0, 0, 1, 1], [], []>} : vector<8x128xf32>, vector<128x128xf32>, vector<8x128xf32> -> vector<8x128xf32>
    %60 = vector.broadcast %58 : vector<1x128xf32> to vector<8x128xf32>
    %61 = arith.addf %59, %60 : vector<8x128xf32>
    %cst_49 = arith.constant 0.000000e+00 : f32
    %62 = vector.broadcast %cst_49 : f32 to vector<8x128xf32>
    %63 = arith.maximumf %61, %62 : vector<8x128xf32>
    %c0_50 = arith.constant 0 : index
    %c0_51 = arith.constant 0 : index
    %64 = vector.load %arg4[%c0_50, %c0_51] : memref<8x128xf32, #tpu.memory_space<vmem>>, vector<8x128xf32>
    tpu.vector_store %arg4[%c0_50, %c0_51], %63 {strides = array<i32>} : memref<8x128xf32, #tpu.memory_space<vmem>>, vector<8x128xf32>,
    return
  }
  func.func @transform_0(%arg0: i32) -> (i32, i32) {
    %c0_i32 = arith.constant 0 : i32
    %c0_i32_0 = arith.constant 0 : i32
    return %arg0, %c0_i32 : i32, i32
  }
  func.func @transform_1(%arg0: i32) -> (i32, i32, i32) {
    %c0_i32 = arith.constant 0 : i32
    %c0_i32_0 = arith.constant 0 : i32
    %c0_i32_1 = arith.constant 0 : i32
    %c0_i32_2 = arith.constant 0 : i32
    return %c0_i32, %c0_i32_0, %c0_i32_1 : i32, i32, i32
  }
  func.func @transform_2(%arg0: i32) -> (i32, i32, i32) {
    %c0_i32 = arith.constant 0 : i32
    %c0_i32_0 = arith.constant 0 : i32
    %c0_i32_1 = arith.constant 0 : i32
    %c0_i32_2 = arith.constant 0 : i32
    return %c0_i32, %c0_i32_0, %c0_i32_1 : i32, i32, i32
  }
  func.func @transform_3(%arg0: i32) -> (i32, i32) {
    %c0_i32 = arith.constant 0 : i32
    %c0_i32_0 = arith.constant 0 : i32
    return %arg0, %c0_i32 : i32, i32
  }
}

</mosaic_0001>

<llo_original>
// kernel: tpu_custom_call.1
$region0: #{tpu_custom_call.1}
  #allocation0 [shape = 'u32[]', space=smem, size = 0x4, offset = 0x4, fixed_abs, tag = 'smem constant byte address 0x4 - core index']
  #allocation1 [shape = 'u32[144,128]{1,0:T(1,128)}', space=vmem, size = 0x12000, scoped, tag = 'internal scratch']
  %s0 = inlined_call_operand.hbm [shape: f32[8,128], index: 0, kind: input, shape index: {}]
  %s1 = inlined_call_operand.hbm [shape: f32[7,128,128], index: 1, kind: input, shape index: {}]
  %s2 = inlined_call_operand.vmem [shape: f32[7,1,128], index: 2, kind: input, shape index: {}]
  %s3 = inlined_call_operand.hbm [shape: f32[8,128], index: 3, kind: output, shape index: {}]
  %s4 = sld [smem:[#allocation0]]
  $region30: #{tpu_custom_call.1} parent=0
    _
  %s6 = ssub.s32 1, %s4
  %s7 = scalar_select 0, %s6, %s4
  $region1: #{tpu_custom_call.1} parent=0
    #allocation2 [shape = 'u8[4096]{0}', space=vmem, size = 0x1000, scoped, tag = 'input window, operand 0, single buffered']
    #allocation3 [shape = 's32[1]{0}', space=sflag, size = 0x4, scoped, tag = 'scoped memory for tpu_custom_call.1']
    #allocation4 [shape = 's32[1]{0}', space=sflag, size = 0x4, scoped, tag = 'scoped memory for tpu_custom_call.1']
    #allocation5 [shape = 'u8[458752]{0}', space=vmem, size = 0x70000, scoped, tag = 'input window, operand 1, single buffered']
    #allocation6 [shape = 's32[1]{0}', space=sflag, size = 0x4, scoped, tag = 'scoped memory for tpu_custom_call.1']
    #allocation7 [shape = 'u8[4096]{0}', space=vmem, size = 0x1000, scoped, tag = 'output window, operand 0, single buffered']
    %8 = vsyncpa [#allocation3], 0
    %9 = vsyncpa [#allocation6], 0
    %10 = vsyncpa [#allocation4], 0
    // Predicated region
    $region2: #{tpu_custom_call.1} parent=1 // pred_check
      _
    $region3: #{tpu_custom_call.1} parent=1 // pred_check_branch
      %12 = sbr.rel (0) target = $region5
    $region4: #{tpu_custom_call.1} parent=1 // pred_region
      %s14 = ssub.s32 128, 128
      %15 = vsyncadd [#allocation3], %s14
      %s17 = sshll.u32 [#allocation2], 4
      %s18 = int_to_ptr.vmem [resolvable:$true] %s17
      %20 = dma.hbm_to_vmem [thread:$0]  %s0, 128, %s18, [#allocation3]
    $region5: #{tpu_custom_call.1} parent=1 // pred_fallthru
      _
    // Predicated region
    $region6: #{tpu_custom_call.1} parent=1 // pred_check
      _
    $region7: #{tpu_custom_call.1} parent=1 // pred_check_branch
      %22 = sbr.rel (0) target = $region9
    $region8: #{tpu_custom_call.1} parent=1 // pred_region
      %s24 = ssub.s32 14336, 14336
      %25 = vsyncadd [#allocation6], %s24
      %s26 = sshll.u32 [#allocation5], 4
      %s27 = int_to_ptr.vmem [resolvable:$true] %s26
      %32 = dma.hbm_to_vmem [thread:$0]  %s1, 14336, %s27, [#allocation6], 128, 128, 8
    $region9: #{tpu_custom_call.1} parent=1 // pred_fallthru
      _
    // Predicated region
    $region10: #{tpu_custom_call.1} parent=1 // pred_check
      _
    $region11: #{tpu_custom_call.1} parent=1 // pred_check_branch
      %34 = sbr.rel (0) target = $region13
    $region12: #{tpu_custom_call.1} parent=1 // pred_region
      _
    $region13: #{tpu_custom_call.1} parent=1 // pred_fallthru
      _
    // Predicated region
    $region14: #{tpu_custom_call.1} parent=1 // pred_check
      _
    $region15: #{tpu_custom_call.1} parent=1 // pred_check_branch
      %36 = sbr.rel (0) target = $region17
    $region16: #{tpu_custom_call.1} parent=1 // pred_region
      %37 = dma.done [#allocation3], 128
    $region17: #{tpu_custom_call.1} parent=1 // pred_fallthru
      _
    // Predicated region
    $region18: #{tpu_custom_call.1} parent=1 // pred_check
      _
    $region19: #{tpu_custom_call.1} parent=1 // pred_check_branch
      %39 = sbr.rel (0) target = $region21
    $region20: #{tpu_custom_call.1} parent=1 // pred_region
      %40 = dma.done [#allocation6], 14336
    $region21: #{tpu_custom_call.1} parent=1 // pred_fallthru
      _
    %v41 = vld [vmem:[#allocation2] sm:$0xff]
    %v42 = vld [vmem:[#allocation5] sm:$0xff]
    %v43 = vld [vmem:[#allocation5 + $0x8] sm:$0xff]
    %v44 = vld [vmem:[#allocation5 + $0x10] sm:$0xff]
    %v45 = vld [vmem:[#allocation5 + $0x18] sm:$0xff]
    %v46 = vld [vmem:[#allocation5 + $0x20] sm:$0xff]
    %v47 = vld [vmem:[#allocation5 + $0x28] sm:$0xff]
    %v48 = vld [vmem:[#allocation5 + $0x30] sm:$0xff]
    %v49 = vld [vmem:[#allocation5 + $0x38] sm:$0xff]
    %v50 = vld [vmem:[#allocation5 + $0x40] sm:$0xff]
    %v51 = vld [vmem:[#allocation5 + $0x48] sm:$0xff]
    %v52 = vld [vmem:[#allocation5 + $0x50] sm:$0xff]
    %v53 = vld [vmem:[#allocation5 + $0x58] sm:$0xff]
    %v54 = vld [vmem:[#allocation5 + $0x60] sm:$0xff]
    %v55 = vld [vmem:[#allocation5 + $0x68] sm:$0xff]
    %v56 = vld [vmem:[#allocation5 + $0x70] sm:$0xff]
    %v57 = vld [vmem:[#allocation5 + $0x78] sm:$0xff]
    %v58 = vld [vmem:[%s2] sm:$0x1]
    %v60 = vlaneseq
    %v61 = vshrl.u32 %v60, 7
    %v62 = vsub.s32 0, %v61
    %v63 = vrot.slane %v58, %v62
    %65 = vmatprep.subr.mxu0 0.0
    %66 = vmatpush1.msra.mxu0 %v42
    %67 = vmatprep.subr.mxu0 0.0
    %68 = vmatpush1.msra.mxu0 %v43
    %69 = vmatprep.subr.mxu0 0.0
    %70 = vmatpush1.msra.mxu0 %v44
    %71 = vmatprep.subr.mxu0 0.0
    %72 = vmatpush1.msra.mxu0 %v45
    %73 = vmatprep.subr.mxu0 0.0
    %74 = vmatpush1.msra.mxu0 %v46
    %75 = vmatprep.subr.mxu0 0.0
    %76 = vmatpush1.msra.mxu0 %v47
    %77 = vmatprep.subr.mxu0 0.0
    %78 = vmatpush1.msra.mxu0 %v48
    %79 = vmatprep.subr.mxu0 0.0
    %80 = vmatpush1.msra.mxu0 %v49
    %81 = vmatprep.subr.mxu0 0.0
    %82 = vmatpush1.msra.mxu0 %v50
    %83 = vmatprep.subr.mxu0 0.0
    %84 = vmatpush1.msra.mxu0 %v51
    %85 = vmatprep.subr.mxu0 0.0
    %86 = vmatpush1.msra.mxu0 %v52
    %87 = vmatprep.subr.mxu0 0.0
    %88 = vmatpush1.msra.mxu0 %v53
    %89 = vmatprep.subr.mxu0 0.0
    %90 = vmatpush1.msra.mxu0 %v54
    %91 = vmatprep.subr.mxu0 0.0
    %92 = vmatpush1.msra.mxu0 %v55
    %93 = vmatprep.subr.mxu0 0.0
    %94 = vmatpush1.msra.mxu0 %v56
    %95 = vmatprep.subr.mxu0 0.0
    %96 = vmatpush1.msra.mxu0 %v57
    %97 = vmatprep.subr.mxu0 0.0
    %98 = vmatpush1.msra.mxu0 0.0
    %99 = vmatprep.subr.mxu0 0.0
    %100 = vmatpush1.msra.mxu0 0.0
    %101 = vmatprep.subr.mxu0 0.0
    %102 = vmatpush1.msra.mxu0 0.0
    %103 = vmatprep.subr.mxu0 0.0
    %104 = vmatpush1.msra.mxu0 0.0
    %105 = vmatprep.subr.mxu0 0.0
    %106 = vmatpush1.msra.mxu0 0.0
    %107 = vmatprep.subr.mxu0 0.0
    %108 = vmatpush1.msra.mxu0 0.0
    %109 = vmatprep.subr.mxu0 0.0
    %110 = vmatpush1.msra.mxu0 0.0
    %111 = vmatprep.subr.mxu0 0.0
    %112 = vmatpush1.msra.mxu0 0.0
    %113 = vmatprep.subr.mxu0 0.0
    %114 = vmatpush1.msra.mxu0 0.0
    %115 = vmatprep.subr.mxu0 0.0
    %116 = vmatpush1.msra.mxu0 0.0
    %117 = vmatprep.subr.mxu0 0.0
    %118 = vmatpush1.msra.mxu0 0.0
    %119 = vmatprep.subr.mxu0 0.0
    %120 = vmatpush1.msra.mxu0 0.0
    %121 = vmatprep.subr.mxu0 0.0
    %122 = vmatpush1.msra.mxu0 0.0
    %123 = vmatprep.subr.mxu0 0.0
    %124 = vmatpush1.msra.mxu0 0.0
    %125 = vmatprep.subr.mxu0 0.0
    %126 = vmatpush1.msra.mxu0 0.0
    %127 = vmatprep.subr.mxu0 0.0
    %128 = vmatpush1.msra.mxu0 0.0
    %129 = vmatprep.mubr.f32.mxu0 0.0
    %130 = vmatmul.mubr.f32.gmra.mrb[0].mxu0 %v41
    %v131 = vpop.f32.mrb[0].mxu0
    %v132 = vadd.f32 %v63, %v131
    %v133 = vpop.f32.mrb[0].mxu0
    %134 = vdwg.mxu0
    %v135 = vmax.f32 %v132, 0.0
    %s136 = scalar_lea.vmem [#allocation5], 128
    %v137 = vld [vmem:[%s136] sm:$0xff]
    %v138 = vld [vmem:[%s136 + $0x8] sm:$0xff]
    %v139 = vld [vmem:[%s136 + $0x10] sm:$0xff]
    %v140 = vld [vmem:[%s136 + $0x18] sm:$0xff]
    %v141 = vld [vmem:[%s136 + $0x20] sm:$0xff]
    %v142 = vld [vmem:[%s136 + $0x28] sm:$0xff]
    %v143 = vld [vmem:[%s136 + $0x30] sm:$0xff]
    %v144 = vld [vmem:[%s136 + $0x38] sm:$0xff]
    %v145 = vld [vmem:[%s136 + $0x40] sm:$0xff]
    %v146 = vld [vmem:[%s136 + $0x48] sm:$0xff]
    %v147 = vld [vmem:[%s136 + $0x50] sm:$0xff]
    %v148 = vld [vmem:[%s136 + $0x58] sm:$0xff]
    %v149 = vld [vmem:[%s136 + $0x60] sm:$0xff]
    %v150 = vld [vmem:[%s136 + $0x68] sm:$0xff]
    %v151 = vld [vmem:[%s136 + $0x70] sm:$0xff]
    %v152 = vld [vmem:[%s136 + $0x78] sm:$0xff]
    %s153 = scalar_lea.vmem %s2, 1
    %v154 = vld [vmem:[%s153] sm:$0x1]
    %v156 = vlaneseq
    %v157 = vshrl.u32 %v156, 7
    %v158 = vsub.s32 0, %v157
    %v159 = vrot.slane %v154, %v158
    %161 = vmatprep.subr.mxu0 0.0
    %162 = vmatpush1.msra.mxu0 %v137
    %163 = vmatprep.subr.mxu0 0.0
    %164 = vmatpush1.msra.mxu0 %v138
    %165 = vmatprep.subr.mxu0 0.0
    %166 = vmatpush1.msra.mxu0 %v139
    %167 = vmatprep.subr.mxu0 0.0
    %168 = vmatpush1.msra.mxu0 %v140
    %169 = vmatprep.subr.mxu0 0.0
    %170 = vmatpush1.msra.mxu0 %v141
    %171 = vmatprep.subr.mxu0 0.0
    %172 = vmatpush1.msra.mxu0 %v142
    %173 = vmatprep.subr.mxu0 0.0
    %174 = vmatpush1.msra.mxu0 %v143
    %175 = vmatprep.subr.mxu0 0.0
    %176 = vmatpush1.msra.mxu0 %v144
    %177 = vmatprep.subr.mxu0 0.0
    %178 = vmatpush1.msra.mxu0 %v145
    %179 = vmatprep.subr.mxu0 0.0
    %180 = vmatpush1.msra.mxu0 %v146
    %181 = vmatprep.subr.mxu0 0.0
    %182 = vmatpush1.msra.mxu0 %v147
    %183 = vmatprep.subr.mxu0 0.0
    %184 = vmatpush1.msra.mxu0 %v148
    %185 = vmatprep.subr.mxu0 0.0
    %186 = vmatpush1.msra.mxu0 %v149
    %187 = vmatprep.subr.mxu0 0.0
    %188 = vmatpush1.msra.mxu0 %v150
    %189 = vmatprep.subr.mxu0 0.0
    %190 = vmatpush1.msra.mxu0 %v151
    %191 = vmatprep.subr.mxu0 0.0
    %192 = vmatpush1.msra.mxu0 %v152
    %193 = vmatprep.subr.mxu0 0.0
    %194 = vmatpush1.msra.mxu0 0.0
    %195 = vmatprep.subr.mxu0 0.0
    %196 = vmatpush1.msra.mxu0 0.0
    %197 = vmatprep.subr.mxu0 0.0
    %198 = vmatpush1.msra.mxu0 0.0
    %199 = vmatprep.subr.mxu0 0.0
    %200 = vmatpush1.msra.mxu0 0.0
    %201 = vmatprep.subr.mxu0 0.0
    %202 = vmatpush1.msra.mxu0 0.0
    %203 = vmatprep.subr.mxu0 0.0
    %204 = vmatpush1.msra.mxu0 0.0
    %205 = vmatprep.subr.mxu0 0.0
    %206 = vmatpush1.msra.mxu0 0.0
    %207 = vmatprep.subr.mxu0 0.0
    %208 = vmatpush1.msra.mxu0 0.0
    %209 = vmatprep.subr.mxu0 0.0
    %210 = vmatpush1.msra.mxu0 0.0
    %211 = vmatprep.subr.mxu0 0.0
    %212 = vmatpush1.msra.mxu0 0.0
    %213 = vmatprep.subr.mxu0 0.0
    %214 = vmatpush1.msra.mxu0 0.0
    %215 = vmatprep.subr.mxu0 0.0
    %216 = vmatpush1.msra.mxu0 0.0
    %217 = vmatprep.subr.mxu0 0.0
    %218 = vmatpush1.msra.mxu0 0.0
    %219 = vmatprep.subr.mxu0 0.0
    %220 = vmatpush1.msra.mxu0 0.0
    %221 = vmatprep.subr.mxu0 0.0
    %222 = vmatpush1.msra.mxu0 0.0
    %223 = vmatprep.subr.mxu0 0.0
    %224 = vmatpush1.msra.mxu0 0.0
    %225 = vmatprep.mubr.f32.mxu0 0.0
    %226 = vmatmul.mubr.f32.gmra.mrb[0].mxu0 %v135
    %v227 = vpop.f32.mrb[0].mxu0
    %v228 = vadd.f32 %v159, %v227
    %v229 = vpop.f32.mrb[0].mxu0
    %230 = vdwg.mxu0
    %v231 = vmax.f32 %v228, 0.0
    %s232 = scalar_lea.vmem [#allocation5], 256
    %v233 = vld [vmem:[%s232] sm:$0xff]
    %v234 = vld [vmem:[%s232 + $0x8] sm:$0xff]
    %v235 = vld [vmem:[%s232 + $0x10] sm:$0xff]
    %v236 = vld [vmem:[%s232 + $0x18] sm:$0xff]
    %v237 = vld [vmem:[%s232 + $0x20] sm:$0xff]
    %v238 = vld [vmem:[%s232 + $0x28] sm:$0xff]
    %v239 = vld [vmem:[%s232 + $0x30] sm:$0xff]
    %v240 = vld [vmem:[%s232 + $0x38] sm:$0xff]
    %v241 = vld [vmem:[%s232 + $0x40] sm:$0xff]
    %v242 = vld [vmem:[%s232 + $0x48] sm:$0xff]
    %v243 = vld [vmem:[%s232 + $0x50] sm:$0xff]
    %v244 = vld [vmem:[%s232 + $0x58] sm:$0xff]
    %v245 = vld [vmem:[%s232 + $0x60] sm:$0xff]
    %v246 = vld [vmem:[%s232 + $0x68] sm:$0xff]
    %v247 = vld [vmem:[%s232 + $0x70] sm:$0xff]
    %v248 = vld [vmem:[%s232 + $0x78] sm:$0xff]
    %s249 = scalar_lea.vmem %s2, 2
    %v250 = vld [vmem:[%s249] sm:$0x1]
    %v252 = vlaneseq
    %v253 = vshrl.u32 %v252, 7
    %v254 = vsub.s32 0, %v253
    %v255 = vrot.slane %v250, %v254
    %257 = vmatprep.subr.mxu0 0.0
    %258 = vmatpush1.msra.mxu0 %v233
    %259 = vmatprep.subr.mxu0 0.0
    %260 = vmatpush1.msra.mxu0 %v234
    %261 = vmatprep.subr.mxu0 0.0
    %262 = vmatpush1.msra.mxu0 %v235
    %263 = vmatprep.subr.mxu0 0.0
    %264 = vmatpush1.msra.mxu0 %v236
    %265 = vmatprep.subr.mxu0 0.0
    %266 = vmatpush1.msra.mxu0 %v237
    %267 = vmatprep.subr.mxu0 0.0
    %268 = vmatpush1.msra.mxu0 %v238
    %269 = vmatprep.subr.mxu0 0.0
    %270 = vmatpush1.msra.mxu0 %v239
    %271 = vmatprep.subr.mxu0 0.0
    %272 = vmatpush1.msra.mxu0 %v240
    %273 = vmatprep.subr.mxu0 0.0
    %274 = vmatpush1.msra.mxu0 %v241
    %275 = vmatprep.subr.mxu0 0.0
    %276 = vmatpush1.msra.mxu0 %v242
    %277 = vmatprep.subr.mxu0 0.0
    %278 = vmatpush1.msra.mxu0 %v243
    %279 = vmatprep.subr.mxu0 0.0
    %280 = vmatpush1.msra.mxu0 %v244
    %281 = vmatprep.subr.mxu0 0.0
    %282 = vmatpush1.msra.mxu0 %v245
    %283 = vmatprep.subr.mxu0 0.0
    %284 = vmatpush1.msra.mxu0 %v246
    %285 = vmatprep.subr.mxu0 0.0
    %286 = vmatpush1.msra.mxu0 %v247
    %287 = vmatprep.subr.mxu0 0.0
    %288 = vmatpush1.msra.mxu0 %v248
    %289 = vmatprep.subr.mxu0 0.0
    %290 = vmatpush1.msra.mxu0 0.0
    %291 = vmatprep.subr.mxu0 0.0
    %292 = vmatpush1.msra.mxu0 0.0
    %293 = vmatprep.subr.mxu0 0.0
    %294 = vmatpush1.msra.mxu0 0.0
    %295 = vmatprep.subr.mxu0 0.0
    %296 = vmatpush1.msra.mxu0 0.0
    %297 = vmatprep.subr.mxu0 0.0
    %298 = vmatpush1.msra.mxu0 0.0
    %299 = vmatprep.subr.mxu0 0.0
    %300 = vmatpush1.msra.mxu0 0.0
    %301 = vmatprep.subr.mxu0 0.0
    %302 = vmatpush1.msra.mxu0 0.0
    %303 = vmatprep.subr.mxu0 0.0
    %304 = vmatpush1.msra.mxu0 0.0
    %305 = vmatprep.subr.mxu0 0.0
    %306 = vmatpush1.msra.mxu0 0.0
    %307 = vmatprep.subr.mxu0 0.0
    %308 = vmatpush1.msra.mxu0 0.0
    %309 = vmatprep.subr.mxu0 0.0
    %310 = vmatpush1.msra.mxu0 0.0
    %311 = vmatprep.subr.mxu0 0.0
    %312 = vmatpush1.msra.mxu0 0.0
    %313 = vmatprep.subr.mxu0 0.0
    %314 = vmatpush1.msra.mxu0 0.0
    %315 = vmatprep.subr.mxu0 0.0
    %316 = vmatpush1.msra.mxu0 0.0
    %317 = vmatprep.subr.mxu0 0.0
    %318 = vmatpush1.msra.mxu0 0.0
    %319 = vmatprep.subr.mxu0 0.0
    %320 = vmatpush1.msra.mxu0 0.0
    %321 = vmatprep.mubr.f32.mxu0 0.0
    %322 = vmatmul.mubr.f32.gmra.mrb[0].mxu0 %v231
    %v323 = vpop.f32.mrb[0].mxu0
    %v324 = vadd.f32 %v255, %v323
    %v325 = vpop.f32.mrb[0].mxu0
    %326 = vdwg.mxu0
    %v327 = vmax.f32 %v324, 0.0
    %s328 = scalar_lea.vmem [#allocation5], 384
    %v329 = vld [vmem:[%s328] sm:$0xff]
    %v330 = vld [vmem:[%s328 + $0x8] sm:$0xff]
    %v331 = vld [vmem:[%s328 + $0x10] sm:$0xff]
    %v332 = vld [vmem:[%s328 + $0x18] sm:$0xff]
    %v333 = vld [vmem:[%s328 + $0x20] sm:$0xff]
    %v334 = vld [vmem:[%s328 + $0x28] sm:$0xff]
    %v335 = vld [vmem:[%s328 + $0x30] sm:$0xff]
    %v336 = vld [vmem:[%s328 + $0x38] sm:$0xff]
    %v337 = vld [vmem:[%s328 + $0x40] sm:$0xff]
    %v338 = vld [vmem:[%s328 + $0x48] sm:$0xff]
    %v339 = vld [vmem:[%s328 + $0x50] sm:$0xff]
    %v340 = vld [vmem:[%s328 + $0x58] sm:$0xff]
    %v341 = vld [vmem:[%s328 + $0x60] sm:$0xff]
    %v342 = vld [vmem:[%s328 + $0x68] sm:$0xff]
    %v343 = vld [vmem:[%s328 + $0x70] sm:$0xff]
    %v344 = vld [vmem:[%s328 + $0x78] sm:$0xff]
    %s345 = scalar_lea.vmem %s2, 3
    %v346 = vld [vmem:[%s345] sm:$0x1]
    %v348 = vlaneseq
    %v349 = vshrl.u32 %v348, 7
    %v350 = vsub.s32 0, %v349
    %v351 = vrot.slane %v346, %v350
    %353 = vmatprep.subr.mxu0 0.0
    %354 = vmatpush1.msra.mxu0 %v329
    %355 = vmatprep.subr.mxu0 0.0
    %356 = vmatpush1.msra.mxu0 %v330
    %357 = vmatprep.subr.mxu0 0.0
    %358 = vmatpush1.msra.mxu0 %v331
    %359 = vmatprep.subr.mxu0 0.0
    %360 = vmatpush1.msra.mxu0 %v332
    %361 = vmatprep.subr.mxu0 0.0
    %362 = vmatpush1.msra.mxu0 %v333
    %363 = vmatprep.subr.mxu0 0.0
    %364 = vmatpush1.msra.mxu0 %v334
    %365 = vmatprep.subr.mxu0 0.0
    %366 = vmatpush1.msra.mxu0 %v335
    %367 = vmatprep.subr.mxu0 0.0
    %368 = vmatpush1.msra.mxu0 %v336
    %369 = vmatprep.subr.mxu0 0.0
    %370 = vmatpush1.msra.mxu0 %v337
    %371 = vmatprep.subr.mxu0 0.0
    %372 = vmatpush1.msra.mxu0 %v338
    %373 = vmatprep.subr.mxu0 0.0
    %374 = vmatpush1.msra.mxu0 %v339
    %375 = vmatprep.subr.mxu0 0.0
    %376 = vmatpush1.msra.mxu0 %v340
    %377 = vmatprep.subr.mxu0 0.0
    %378 = vmatpush1.msra.mxu0 %v341
    %379 = vmatprep.subr.mxu0 0.0
    %380 = vmatpush1.msra.mxu0 %v342
    %381 = vmatprep.subr.mxu0 0.0
    %382 = vmatpush1.msra.mxu0 %v343
    %383 = vmatprep.subr.mxu0 0.0
    %384 = vmatpush1.msra.mxu0 %v344
    %385 = vmatprep.subr.mxu0 0.0
    %386 = vmatpush1.msra.mxu0 0.0
    %387 = vmatprep.subr.mxu0 0.0
    %388 = vmatpush1.msra.mxu0 0.0
    %389 = vmatprep.subr.mxu0 0.0
    %390 = vmatpush1.msra.mxu0 0.0
    %391 = vmatprep.subr.mxu0 0.0
    %392 = vmatpush1.msra.mxu0 0.0
    %393 = vmatprep.subr.mxu0 0.0
    %394 = vmatpush1.msra.mxu0 0.0
    %395 = vmatprep.subr.mxu0 0.0
    %396 = vmatpush1.msra.mxu0 0.0
    %397 = vmatprep.subr.mxu0 0.0
    %398 = vmatpush1.msra.mxu0 0.0
    %399 = vmatprep.subr.mxu0 0.0
    %400 = vmatpush1.msra.mxu0 0.0
    %401 = vmatprep.subr.mxu0 0.0
    %402 = vmatpush1.msra.mxu0 0.0
    %403 = vmatprep.subr.mxu0 0.0
    %404 = vmatpush1.msra.mxu0 0.0
    %405 = vmatprep.subr.mxu0 0.0
    %406 = vmatpush1.msra.mxu0 0.0
    %407 = vmatprep.subr.mxu0 0.0
    %408 = vmatpush1.msra.mxu0 0.0
    %409 = vmatprep.subr.mxu0 0.0
    %410 = vmatpush1.msra.mxu0 0.0
    %411 = vmatprep.subr.mxu0 0.0
    %412 = vmatpush1.msra.mxu0 0.0
    %413 = vmatprep.subr.mxu0 0.0
    %414 = vmatpush1.msra.mxu0 0.0
    %415 = vmatprep.subr.mxu0 0.0
    %416 = vmatpush1.msra.mxu0 0.0
    %417 = vmatprep.mubr.f32.mxu0 0.0
    %418 = vmatmul.mubr.f32.gmra.mrb[0].mxu0 %v327
    %v419 = vpop.f32.mrb[0].mxu0
    %v420 = vadd.f32 %v351, %v419
    %v421 = vpop.f32.mrb[0].mxu0
    %422 = vdwg.mxu0
    %v423 = vmax.f32 %v420, 0.0
    %s424 = scalar_lea.vmem [#allocation5], 512
    %v425 = vld [vmem:[%s424] sm:$0xff]
    %v426 = vld [vmem:[%s424 + $0x8] sm:$0xff]
    %v427 = vld [vmem:[%s424 + $0x10] sm:$0xff]
    %v428 = vld [vmem:[%s424 + $0x18] sm:$0xff]
    %v429 = vld [vmem:[%s424 + $0x20] sm:$0xff]
    %v430 = vld [vmem:[%s424 + $0x28] sm:$0xff]
    %v431 = vld [vmem:[%s424 + $0x30] sm:$0xff]
    %v432 = vld [vmem:[%s424 + $0x38] sm:$0xff]
    %v433 = vld [vmem:[%s424 + $0x40] sm:$0xff]
    %v434 = vld [vmem:[%s424 + $0x48] sm:$0xff]
    %v435 = vld [vmem:[%s424 + $0x50] sm:$0xff]
    %v436 = vld [vmem:[%s424 + $0x58] sm:$0xff]
    %v437 = vld [vmem:[%s424 + $0x60] sm:$0xff]
    %v438 = vld [vmem:[%s424 + $0x68] sm:$0xff]
    %v439 = vld [vmem:[%s424 + $0x70] sm:$0xff]
    %v440 = vld [vmem:[%s424 + $0x78] sm:$0xff]
    %s441 = scalar_lea.vmem %s2, 4
    %v442 = vld [vmem:[%s441] sm:$0x1]
    %v444 = vlaneseq
    %v445 = vshrl.u32 %v444, 7
    %v446 = vsub.s32 0, %v445
    %v447 = vrot.slane %v442, %v446
    %449 = vmatprep.subr.mxu0 0.0
    %450 = vmatpush1.msra.mxu0 %v425
    %451 = vmatprep.subr.mxu0 0.0
    %452 = vmatpush1.msra.mxu0 %v426
    %453 = vmatprep.subr.mxu0 0.0
    %454 = vmatpush1.msra.mxu0 %v427
    %455 = vmatprep.subr.mxu0 0.0
    %456 = vmatpush1.msra.mxu0 %v428
    %457 = vmatprep.subr.mxu0 0.0
    %458 = vmatpush1.msra.mxu0 %v429
    %459 = vmatprep.subr.mxu0 0.0
    %460 = vmatpush1.msra.mxu0 %v430
    %461 = vmatprep.subr.mxu0 0.0
    %462 = vmatpush1.msra.mxu0 %v431
    %463 = vmatprep.subr.mxu0 0.0
    %464 = vmatpush1.msra.mxu0 %v432
    %465 = vmatprep.subr.mxu0 0.0
    %466 = vmatpush1.msra.mxu0 %v433
    %467 = vmatprep.subr.mxu0 0.0
    %468 = vmatpush1.msra.mxu0 %v434
    %469 = vmatprep.subr.mxu0 0.0
    %470 = vmatpush1.msra.mxu0 %v435
    %471 = vmatprep.subr.mxu0 0.0
    %472 = vmatpush1.msra.mxu0 %v436
    %473 = vmatprep.subr.mxu0 0.0
    %474 = vmatpush1.msra.mxu0 %v437
    %475 = vmatprep.subr.mxu0 0.0
    %476 = vmatpush1.msra.mxu0 %v438
    %477 = vmatprep.subr.mxu0 0.0
    %478 = vmatpush1.msra.mxu0 %v439
    %479 = vmatprep.subr.mxu0 0.0
    %480 = vmatpush1.msra.mxu0 %v440
    %481 = vmatprep.subr.mxu0 0.0
    %482 = vmatpush1.msra.mxu0 0.0
    %483 = vmatprep.subr.mxu0 0.0
    %484 = vmatpush1.msra.mxu0 0.0
    %485 = vmatprep.subr.mxu0 0.0
    %486 = vmatpush1.msra.mxu0 0.0
    %487 = vmatprep.subr.mxu0 0.0
    %488 = vmatpush1.msra.mxu0 0.0
    %489 = vmatprep.subr.mxu0 0.0
    %490 = vmatpush1.msra.mxu0 0.0
    %491 = vmatprep.subr.mxu0 0.0
    %492 = vmatpush1.msra.mxu0 0.0
    %493 = vmatprep.subr.mxu0 0.0
    %494 = vmatpush1.msra.mxu0 0.0
    %495 = vmatprep.subr.mxu0 0.0
    %496 = vmatpush1.msra.mxu0 0.0
    %497 = vmatprep.subr.mxu0 0.0
    %498 = vmatpush1.msra.mxu0 0.0
    %499 = vmatprep.subr.mxu0 0.0
    %500 = vmatpush1.msra.mxu0 0.0
    %501 = vmatprep.subr.mxu0 0.0
    %502 = vmatpush1.msra.mxu0 0.0
    %503 = vmatprep.subr.mxu0 0.0
    %504 = vmatpush1.msra.mxu0 0.0
    %505 = vmatprep.subr.mxu0 0.0
    %506 = vmatpush1.msra.mxu0 0.0
    %507 = vmatprep.subr.mxu0 0.0
    %508 = vmatpush1.msra.mxu0 0.0
    %509 = vmatprep.subr.mxu0 0.0
    %510 = vmatpush1.msra.mxu0 0.0
    %511 = vmatprep.subr.mxu0 0.0
    %512 = vmatpush1.msra.mxu0 0.0
    %513 = vmatprep.mubr.f32.mxu0 0.0
    %514 = vmatmul.mubr.f32.gmra.mrb[0].mxu0 %v423
    %v515 = vpop.f32.mrb[0].mxu0
    %v516 = vadd.f32 %v447, %v515
    %v517 = vpop.f32.mrb[0].mxu0
    %518 = vdwg.mxu0
    %v519 = vmax.f32 %v516, 0.0
    %s520 = scalar_lea.vmem [#allocation5], 640
    %v521 = vld [vmem:[%s520] sm:$0xff]
    %v522 = vld [vmem:[%s520 + $0x8] sm:$0xff]
    %v523 = vld [vmem:[%s520 + $0x10] sm:$0xff]
    %v524 = vld [vmem:[%s520 + $0x18] sm:$0xff]
    %v525 = vld [vmem:[%s520 + $0x20] sm:$0xff]
    %v526 = vld [vmem:[%s520 + $0x28] sm:$0xff]
    %v527 = vld [vmem:[%s520 + $0x30] sm:$0xff]
    %v528 = vld [vmem:[%s520 + $0x38] sm:$0xff]
    %v529 = vld [vmem:[%s520 + $0x40] sm:$0xff]
    %v530 = vld [vmem:[%s520 + $0x48] sm:$0xff]
    %v531 = vld [vmem:[%s520 + $0x50] sm:$0xff]
    %v532 = vld [vmem:[%s520 + $0x58] sm:$0xff]
    %v533 = vld [vmem:[%s520 + $0x60] sm:$0xff]
    %v534 = vld [vmem:[%s520 + $0x68] sm:$0xff]
    %v535 = vld [vmem:[%s520 + $0x70] sm:$0xff]
    %v536 = vld [vmem:[%s520 + $0x78] sm:$0xff]
    %s537 = scalar_lea.vmem %s2, 5
    %v538 = vld [vmem:[%s537] sm:$0x1]
    %v540 = vlaneseq
    %v541 = vshrl.u32 %v540, 7
    %v542 = vsub.s32 0, %v541
    %v543 = vrot.slane %v538, %v542
    %545 = vmatprep.subr.mxu0 0.0
    %546 = vmatpush1.msra.mxu0 %v521
    %547 = vmatprep.subr.mxu0 0.0
    %548 = vmatpush1.msra.mxu0 %v522
    %549 = vmatprep.subr.mxu0 0.0
    %550 = vmatpush1.msra.mxu0 %v523
    %551 = vmatprep.subr.mxu0 0.0
    %552 = vmatpush1.msra.mxu0 %v524
    %553 = vmatprep.subr.mxu0 0.0
    %554 = vmatpush1.msra.mxu0 %v525
    %555 = vmatprep.subr.mxu0 0.0
    %556 = vmatpush1.msra.mxu0 %v526
    %557 = vmatprep.subr.mxu0 0.0
    %558 = vmatpush1.msra.mxu0 %v527
    %559 = vmatprep.subr.mxu0 0.0
    %560 = vmatpush1.msra.mxu0 %v528
    %561 = vmatprep.subr.mxu0 0.0
    %562 = vmatpush1.msra.mxu0 %v529
    %563 = vmatprep.subr.mxu0 0.0
    %564 = vmatpush1.msra.mxu0 %v530
    %565 = vmatprep.subr.mxu0 0.0
    %566 = vmatpush1.msra.mxu0 %v531
    %567 = vmatprep.subr.mxu0 0.0
    %568 = vmatpush1.msra.mxu0 %v532
    %569 = vmatprep.subr.mxu0 0.0
    %570 = vmatpush1.msra.mxu0 %v533
    %571 = vmatprep.subr.mxu0 0.0
    %572 = vmatpush1.msra.mxu0 %v534
    %573 = vmatprep.subr.mxu0 0.0
    %574 = vmatpush1.msra.mxu0 %v535
    %575 = vmatprep.subr.mxu0 0.0
    %576 = vmatpush1.msra.mxu0 %v536
    %577 = vmatprep.subr.mxu0 0.0
    %578 = vmatpush1.msra.mxu0 0.0
    %579 = vmatprep.subr.mxu0 0.0
    %580 = vmatpush1.msra.mxu0 0.0
    %581 = vmatprep.subr.mxu0 0.0
    %582 = vmatpush1.msra.mxu0 0.0
    %583 = vmatprep.subr.mxu0 0.0
    %584 = vmatpush1.msra.mxu0 0.0
    %585 = vmatprep.subr.mxu0 0.0
    %586 = vmatpush1.msra.mxu0 0.0
    %587 = vmatprep.subr.mxu0 0.0
    %588 = vmatpush1.msra.mxu0 0.0
    %589 = vmatprep.subr.mxu0 0.0
    %590 = vmatpush1.msra.mxu0 0.0
    %591 = vmatprep.subr.mxu0 0.0
    %592 = vmatpush1.msra.mxu0 0.0
    %593 = vmatprep.subr.mxu0 0.0
    %594 = vmatpush1.msra.mxu0 0.0
    %595 = vmatprep.subr.mxu0 0.0
    %596 = vmatpush1.msra.mxu0 0.0
    %597 = vmatprep.subr.mxu0 0.0
    %598 = vmatpush1.msra.mxu0 0.0
    %599 = vmatprep.subr.mxu0 0.0
    %600 = vmatpush1.msra.mxu0 0.0
    %601 = vmatprep.subr.mxu0 0.0
    %602 = vmatpush1.msra.mxu0 0.0
    %603 = vmatprep.subr.mxu0 0.0
    %604 = vmatpush1.msra.mxu0 0.0
    %605 = vmatprep.subr.mxu0 0.0
    %606 = vmatpush1.msra.mxu0 0.0
    %607 = vmatprep.subr.mxu0 0.0
    %608 = vmatpush1.msra.mxu0 0.0
    %609 = vmatprep.mubr.f32.mxu0 0.0
    %610 = vmatmul.mubr.f32.gmra.mrb[0].mxu0 %v519
    %v611 = vpop.f32.mrb[0].mxu0
    %v612 = vadd.f32 %v543, %v611
    %v613 = vpop.f32.mrb[0].mxu0
    %614 = vdwg.mxu0
    %v615 = vmax.f32 %v612, 0.0
    %s616 = scalar_lea.vmem [#allocation5], 768
    %v617 = vld [vmem:[%s616] sm:$0xff]
    %v618 = vld [vmem:[%s616 + $0x8] sm:$0xff]
    %v619 = vld [vmem:[%s616 + $0x10] sm:$0xff]
    %v620 = vld [vmem:[%s616 + $0x18] sm:$0xff]
    %v621 = vld [vmem:[%s616 + $0x20] sm:$0xff]
    %v622 = vld [vmem:[%s616 + $0x28] sm:$0xff]
    %v623 = vld [vmem:[%s616 + $0x30] sm:$0xff]
    %v624 = vld [vmem:[%s616 + $0x38] sm:$0xff]
    %v625 = vld [vmem:[%s616 + $0x40] sm:$0xff]
    %v626 = vld [vmem:[%s616 + $0x48] sm:$0xff]
    %v627 = vld [vmem:[%s616 + $0x50] sm:$0xff]
    %v628 = vld [vmem:[%s616 + $0x58] sm:$0xff]
    %v629 = vld [vmem:[%s616 + $0x60] sm:$0xff]
    %v630 = vld [vmem:[%s616 + $0x68] sm:$0xff]
    %v631 = vld [vmem:[%s616 + $0x70] sm:$0xff]
    %v632 = vld [vmem:[%s616 + $0x78] sm:$0xff]
    %s633 = scalar_lea.vmem %s2, 6
    %v634 = vld [vmem:[%s633] sm:$0x1]
    %v636 = vlaneseq
    %v637 = vshrl.u32 %v636, 7
    %v638 = vsub.s32 0, %v637
    %v639 = vrot.slane %v634, %v638
    %641 = vmatprep.subr.mxu0 0.0
    %642 = vmatpush1.msra.mxu0 %v617
    %643 = vmatprep.subr.mxu0 0.0
    %644 = vmatpush1.msra.mxu0 %v618
    %645 = vmatprep.subr.mxu0 0.0
    %646 = vmatpush1.msra.mxu0 %v619
    %647 = vmatprep.subr.mxu0 0.0
    %648 = vmatpush1.msra.mxu0 %v620
    %649 = vmatprep.subr.mxu0 0.0
    %650 = vmatpush1.msra.mxu0 %v621
    %651 = vmatprep.subr.mxu0 0.0
    %652 = vmatpush1.msra.mxu0 %v622
    %653 = vmatprep.subr.mxu0 0.0
    %654 = vmatpush1.msra.mxu0 %v623
    %655 = vmatprep.subr.mxu0 0.0
    %656 = vmatpush1.msra.mxu0 %v624
    %657 = vmatprep.subr.mxu0 0.0
    %658 = vmatpush1.msra.mxu0 %v625
    %659 = vmatprep.subr.mxu0 0.0
    %660 = vmatpush1.msra.mxu0 %v626
    %661 = vmatprep.subr.mxu0 0.0
    %662 = vmatpush1.msra.mxu0 %v627
    %663 = vmatprep.subr.mxu0 0.0
    %664 = vmatpush1.msra.mxu0 %v628
    %665 = vmatprep.subr.mxu0 0.0
    %666 = vmatpush1.msra.mxu0 %v629
    %667 = vmatprep.subr.mxu0 0.0
    %668 = vmatpush1.msra.mxu0 %v630
    %669 = vmatprep.subr.mxu0 0.0
    %670 = vmatpush1.msra.mxu0 %v631
    %671 = vmatprep.subr.mxu0 0.0
    %672 = vmatpush1.msra.mxu0 %v632
    %673 = vmatprep.subr.mxu0 0.0
    %674 = vmatpush1.msra.mxu0 0.0
    %675 = vmatprep.subr.mxu0 0.0
    %676 = vmatpush1.msra.mxu0 0.0
    %677 = vmatprep.subr.mxu0 0.0
    %678 = vmatpush1.msra.mxu0 0.0
    %679 = vmatprep.subr.mxu0 0.0
    %680 = vmatpush1.msra.mxu0 0.0
    %681 = vmatprep.subr.mxu0 0.0
    %682 = vmatpush1.msra.mxu0 0.0
    %683 = vmatprep.subr.mxu0 0.0
    %684 = vmatpush1.msra.mxu0 0.0
    %685 = vmatprep.subr.mxu0 0.0
    %686 = vmatpush1.msra.mxu0 0.0
    %687 = vmatprep.subr.mxu0 0.0
    %688 = vmatpush1.msra.mxu0 0.0
    %689 = vmatprep.subr.mxu0 0.0
    %690 = vmatpush1.msra.mxu0 0.0
    %691 = vmatprep.subr.mxu0 0.0
    %692 = vmatpush1.msra.mxu0 0.0
    %693 = vmatprep.subr.mxu0 0.0
    %694 = vmatpush1.msra.mxu0 0.0
    %695 = vmatprep.subr.mxu0 0.0
    %696 = vmatpush1.msra.mxu0 0.0
    %697 = vmatprep.subr.mxu0 0.0
    %698 = vmatpush1.msra.mxu0 0.0
    %699 = vmatprep.subr.mxu0 0.0
    %700 = vmatpush1.msra.mxu0 0.0
    %701 = vmatprep.subr.mxu0 0.0
    %702 = vmatpush1.msra.mxu0 0.0
    %703 = vmatprep.subr.mxu0 0.0
    %704 = vmatpush1.msra.mxu0 0.0
    %705 = vmatprep.mubr.f32.mxu0 0.0
    %706 = vmatmul.mubr.f32.gmra.mrb[0].mxu0 %v615
    %v707 = vpop.f32.mrb[0].mxu0
    %v708 = vadd.f32 %v639, %v707
    %v709 = vpop.f32.mrb[0].mxu0
    %710 = vdwg.mxu0
    %v711 = vmax.f32 %v708, 0.0
    %712 = vst [vmem:[#allocation7] sm:$0xff] %v711
    // Predicated region
    $region22: #{tpu_custom_call.1} parent=1 // pred_check
      _
    $region23: #{tpu_custom_call.1} parent=1 // pred_check_branch
      %714 = sbr.rel (0) target = $region25
    $region24: #{tpu_custom_call.1} parent=1 // pred_region
      %s716 = ssub.s32 128, 128
      %717 = vsyncadd [#allocation4], %s716
      %s719 = sshll.u32 [#allocation7], 4
      %s720 = int_to_ptr.vmem [resolvable:$true] %s719
      %722 = dma.vmem_to_hbm [thread:$0]  %s720, 128, %s3, [#allocation4]
    $region25: #{tpu_custom_call.1} parent=1 // pred_fallthru
      _
    // Predicated region
    $region26: #{tpu_custom_call.1} parent=1 // pred_check
      _
    $region27: #{tpu_custom_call.1} parent=1 // pred_check_branch
      %724 = sbr.rel (0) target = $region29
    $region28: #{tpu_custom_call.1} parent=1 // pred_region
      %725 = dma.done [#allocation4], 128
    $region29: #{tpu_custom_call.1} parent=1 // pred_fallthru
      _
    %726 = vsyncpa [#allocation3], 1
    %727 = vsyncpa [#allocation6], 1
    %728 = vsyncpa [#allocation4], 1

</llo_original>
